<compile_context>
chip_gen: v6e
topology: v6e:2x2x1
jax: 0.10.0
libtpu: 0.0.40
codegen_flags: <defaults>
</compile_context>

<pallas_src>
import functools
import math

import jax
import jax.numpy as jnp
from jax import lax
from jax.experimental import pallas as pl
from jax.experimental.pallas import tpu as pltpu

_NEG_LOG_1E4 = -math.log(1e-4)   # = -log(clip(one_hot == 0, 1e-4, 1.0))


def _cdiv(a, b):
    return (a + b - 1) // b


def _round_up(a, b):
    return _cdiv(a, b) * b


def _device_config():
    """Per-chip tiling budgets (VMEM bytes) and TensorCore count."""
    try:
        kind = jax.devices()[0].device_kind.lower()
    except Exception:  # pragma: no cover - defensive
        kind = ""
    if "v7" in kind:
        # v7x: 2 TensorCores/chip, only 64 MiB physical VMEM per core.
        return dict(num_cores=2, block_budget=32 << 20,
                    vmem_limit=44 << 20, vmem_cap=56 << 20)
    if "v6" in kind or "v5" in kind:
        # v5e/v6e: 1 TensorCore, 128 MiB physical VMEM -> big blocks.
        return dict(num_cores=1, block_budget=56 << 20,
                    vmem_limit=72 << 20, vmem_cap=96 << 20)
    # Unknown part: conservative defaults.
    return dict(num_cores=1, block_budget=20 << 20,
                vmem_limit=32 << 20, vmem_cap=48 << 20)


def _nce_rce_kernel(logits_ref, labels_ref, out_ref, acc_ref, cls_ref, *,
                    alpha, beta, n_rows, num_classes, tiles_per_slice,
                    block_rows, exact_clip):
    p = pl.program_id(0)          # parallel slice (TensorCore sharding on v7x)
    t = pl.program_id(1)          # batch-tile reduction step

    @pl.when(t == 0)
    def _():
        acc_ref[...] = jnp.zeros_like(acc_ref)
        # Grid-invariant class-index row, cached once per slice instead of
        # regenerating a (TN, C) iota every step.
        cls_ref[...] = lax.broadcasted_iota(jnp.int32, cls_ref.shape, 1)

    x = logits_ref[...].astype(jnp.float32)            # (TN, C)
    labels = labels_ref[...]                           # (TN, 1) int32
    tn, c = x.shape

    # Mask rows past the true batch size (padded boundary tile and clamped
    # overshoot tiles contribute zero).
    tile_idx = p * tiles_per_slice + t
    row_ids = tile_idx * block_rows + lax.broadcasted_iota(jnp.int32, (tn, 1), 0)
    row_mask = row_ids < n_rows                        # (TN, 1) bool

    # Boolean label mask from the cached iota (sublane broadcast, no float
    # one-hot tile materialized).
    cls_idx = jnp.broadcast_to(cls_ref[...], (tn, c))  # (TN, C)
    lab_mask = cls_idx == labels                       # (TN, C)

    # Per-row lane reductions over the class axis.
    m = jnp.max(x, axis=1, keepdims=True)                              # (TN, 1)
    sx = jnp.sum(x, axis=1, keepdims=True)                             # (TN, 1)
    x_lab = jnp.sum(jnp.where(lab_mask, x, 0.0), axis=1, keepdims=True)  # (TN, 1)
    e = jnp.exp(x - m)                                 # only full-tile transcendental
    s = jnp.sum(e, axis=1, keepdims=True)                              # (TN, 1)
    lse = m + jnp.log(s)                               # per-row logsumexp (tiny log)

    # Normalized Cross Entropy per row (log_softmax tile eliminated):
    #   -sum(one_hot*log_sm) = lse - x_lab ;  -sum(log_sm) = C*lse - sum(x).
    nce = (lse - x_lab) / (float(num_classes) * lse - sx)              # (TN, 1)

    # Reverse Cross Entropy per row.  log(clip(one_hot, 1e-4, 1)) is 0 at the
    # label and log(1e-4) elsewhere, so
    #   rce = -log(1e-4) * (sum(clip(softmax, 1e-7, 1)) - clip(softmax[label])).
    p_lab = jnp.maximum(jnp.exp(x_lab - m) / s, 1e-7)                  # (TN, 1)
    if exact_clip:
        # Exact PyTorch clamp semantics: keep the clipped-softmax reduction
        # (exact divide on the (TN,1) denominator, no approx reciprocal).
        sm_c_sum = jnp.sum(jnp.maximum(e * (1.0 / s), 1e-7),
                           axis=1, keepdims=True)                      # (TN, 1)
    else:
        # sum(softmax) == 1; deviation bounded by C * 1e-7 * |log(1e-4)|.
        sm_c_sum = 1.0
    rce = _NEG_LOG_1E4 * (sm_c_sum - p_lab)                            # (TN, 1)

    # TODO(synk): WeightAttachment with weight=None is identity; a per-class
    # weight tensor is not applied here.
    per_row = alpha * nce + beta * rce
    acc_ref[...] += jnp.where(row_mask, per_row, 0.0)

    @pl.when(t == tiles_per_slice - 1)
    def _():
        # Lane-dense, unmasked full-block store of this slice's partial sum.
        out_ref[...] = jnp.full(out_ref.shape, jnp.sum(acc_ref[...]), jnp.float32)


def nce_and_rce(logits, labels, *, alpha=1.0, beta=1.0, block_rows=None,
                exact_softmax_clip=True):
    """JAX/Pallas equivalent of NCEAndRCE(num_classes=C, alpha, beta, 'mean')."""
    n, c = logits.shape
    labels2d = labels.reshape(n, 1).astype(jnp.int32)
    itemsize = jnp.dtype(logits.dtype).itemsize
    cfg = _device_config()

    # --- block sizing against VMEM (lane-padded) --------------------------
    c_pad = _round_up(c, 128)                    # VMEM lane padding of the class axis
    n_f32_tiles = 3 if exact_softmax_clip else 2  # live (TN, C) f32 intermediates
    per_row_vmem = (2 * c_pad * itemsize          # double-buffered logits block
                    + n_f32_tiles * c_pad * 4     # f32 working tiles (x / e / clipped sm)
                    + 8 * 128 * 4)                # lane-padded (TN,1) temps + accumulator
    if block_rows is None:
        tn = max(8, (cfg["block_budget"] // per_row_vmem) // 8 * 8)
    else:
        tn = max(8, (block_rows // 8) * 8)
    tn = min(tn, _round_up(n, 8))

    # Guard: large-C problems can exceed the scoped-VMEM limit even at tn=8.
    vmem_limit = cfg["vmem_limit"]
    need = per_row_vmem * tn + (2 << 20)
    if need > vmem_limit:
        if need <= cfg["vmem_cap"]:
            vmem_limit = need
        else:
            raise ValueError(
                f"NCE+RCE block of {tn}x{c} needs ~{need >> 20} MiB VMEM, exceeding "
                f"this chip's usable budget (~{cfg['vmem_cap'] >> 20} MiB); reduce "
                f"block_rows or split the class axis.")

    total_tiles = _cdiv(n, tn)
    # One slice per TensorCore (2 on v7x, 1 on v5e/v6e): avoids a duplicated,
    # fully-masked overshoot tile and redundant accumulator re-init on 1-TC parts.
    num_slices = cfg["num_cores"] if total_tiles >= cfg["num_cores"] else 1
    tiles_per_slice = _cdiv(total_tiles, num_slices)   # overshoot <= 1 tile total
    last_tile = total_tiles - 1

    def logits_map(p, t):
        return (jnp.minimum(p * tiles_per_slice + t, last_tile), 0)

    def labels_map(p, t):
        return (jnp.minimum(p * tiles_per_slice + t, last_tile), 0)

    def out_map(p, t):
        return (p, 0, 0)

    kernel = functools.partial(
        _nce_rce_kernel, alpha=float(alpha), beta=float(beta),
        n_rows=n, num_classes=c, tiles_per_slice=tiles_per_slice,
        block_rows=tn, exact_clip=bool(exact_softmax_clip))

    flops_per_elem = 10 if exact_softmax_clip else 7
    partials = pl.pallas_call(
        kernel,
        out_shape=jax.ShapeDtypeStruct((num_slices, 8, 128), jnp.float32),
        grid=(num_slices, tiles_per_slice),
        in_specs=[
            pl.BlockSpec((tn, c), logits_map),      # native dtype, no wrapper cast
            pl.BlockSpec((tn, 1), labels_map),
        ],
        out_specs=pl.BlockSpec((1, 8, 128), out_map),
        scratch_shapes=[
            pltpu.VMEM((tn, 1), jnp.float32),       # per-slice row accumulator
            pltpu.VMEM((1, c), jnp.int32),          # cached class-index iota
        ],
        compiler_params=pltpu.CompilerParams(
            dimension_semantics=("parallel", "arbitrary"),
            vmem_limit_bytes=int(vmem_limit)),
        cost_estimate=pl.CostEstimate(
            flops=flops_per_elem * n * c,
            transcendentals=n * c,
            bytes_accessed=n * c * itemsize + 4 * n + num_slices * 8 * 128 * 4),
    )(logits, labels2d)

    # Per-slice partial sums -> global mean (divide by the true N once).
    return jnp.sum(partials[:, 0, 0]) / jnp.float32(n)


def _reference(logits, labels, alpha=1.0, beta=1.0):
    # Pure-JAX reference mirroring the PyTorch module semantics.
    c = logits.shape[1]
    log_sm = jax.nn.log_softmax(logits.astype(jnp.float32), axis=1)
    one_hot = jax.nn.one_hot(labels, c, dtype=jnp.float32)
    nce = (-jnp.sum(one_hot * log_sm, axis=1)) / (-jnp.sum(log_sm, axis=1))
    sm = jnp.clip(jax.nn.softmax(logits.astype(jnp.float32), axis=1), 1e-7, 1.0)
    rce = -jnp.sum(sm * jnp.log(jnp.clip(one_hot, 1e-4, 1.0)), axis=1)
    return alpha * jnp.mean(nce) + beta * jnp.mean(rce)


if __name__ == "__main__":
    key = jax.random.PRNGKey(0)
    k1, k2, k3, k4 = jax.random.split(key, 4)

    # Case 1: small single-tile problem.
    batch, num_classes = 8, 10
    logits = jax.random.normal(k1, (batch, num_classes), dtype=jnp.float32)
    labels = jax.random.randint(k2, (batch,), 0, num_classes, dtype=jnp.int32)
    loss = jax.block_until_ready(nce_and_rce(logits, labels, alpha=1.0, beta=1.0))
    ref = _reference(logits, labels, alpha=1.0, beta=1.0)
    assert jnp.allclose(loss, ref, atol=1e-5, rtol=1e-5), (loss, ref)

    # Case 2: exercises the multi-tile reduction axis, boundary-tile row
    # masking and (on v7x) the 2-slice parallel axis with one clamped
    # overshoot tile (batch not a multiple of the tile).
    batch2 = 20
    logits2 = jax.random.normal(k3, (batch2, num_classes), dtype=jnp.float32)
    labels2 = jax.random.randint(k4, (batch2,), 0, num_classes, dtype=jnp.int32)
    loss2 = jax.block_until_ready(
        nce_and_rce(logits2, labels2, alpha=0.5, beta=2.0, block_rows=8))
    ref2 = _reference(logits2, labels2, alpha=0.5, beta=2.0)
    assert jnp.allclose(loss2, ref2, atol=1e-5, rtol=1e-5), (loss2, ref2)

    print("KERNEL_OK")
</pallas_src>

<mosaic_0001>
module attributes {stable_mosaic.version = 11 : i64} {
  func.func @_nce_rce_kernel(%arg0: i32, %arg1: i32, %arg2: memref<8x10xf32, #tpu.memory_space<vmem>>, %arg3: memref<8x1xi32, #tpu.memory_space<vmem>>, %arg4: memref<1x8x128xf32, #tpu.memory_space<vmem>>, %arg5: memref<8x1xf32, #tpu.memory_space<vmem>>, %arg6: memref<1x10xi32, #tpu.memory_space<vmem>>) attributes {dimension_semantics = [#tpu.dimension_semantics<parallel>, #tpu.dimension_semantics<arbitrary>], iteration_bounds = array<i64: 1, 1>, scalar_prefetch = 0 : i64, scratch_operands = 2 : i64, tpu.core_type = #tpu.core_type<tc>, window_params = [{transform_indices = @transform_0, window_bounds = array<i64: 8, 10>}, {transform_indices = @transform_1, window_bounds = array<i64: 8, 1>}, {transform_indices = @transform_2, window_bounds = array<i64: 1, 8, 128>}]} {
    %c0_i32 = arith.constant 0 : i32
    %0 = arith.cmpi eq, %arg1, %c0_i32 : i32
    %1 = arith.extui %0 : i1 to i32
    %c0_i32_0 = arith.constant 0 : i32
    %2 = arith.cmpi ne, %1, %c0_i32_0 : i32
    scf.if %2 {
      %cst_26 = arith.constant 0.000000e+00 : f32
      %67 = vector.broadcast %cst_26 : f32 to vector<8x1xf32>
      %c0_27 = arith.constant 0 : index
      %c0_28 = arith.constant 0 : index
      %68 = vector.load %arg5[%c0_27, %c0_28] : memref<8x1xf32, #tpu.memory_space<vmem>>, vector<8x1xf32>
      tpu.vector_store %arg5[%c0_27, %c0_28], %67 {strides = array<i32>} : memref<8x1xf32, #tpu.memory_space<vmem>>, vector<8x1xf32>,
      %69 = tpu.iota {dimensions = array<i32: 1>} : vector<1x10xi32>
      %c0_29 = arith.constant 0 : index
      %c0_30 = arith.constant 0 : index
      %70 = vector.load %arg6[%c0_29, %c0_30] : memref<1x10xi32, #tpu.memory_space<vmem>>, vector<1x10xi32>
      tpu.vector_store %arg6[%c0_29, %c0_30], %69 {strides = array<i32>} : memref<1x10xi32, #tpu.memory_space<vmem>>, vector<1x10xi32>,
    } else {
    }
    %c0 = arith.constant 0 : index
    %c0_1 = arith.constant 0 : index
    %3 = vector.load %arg2[%c0, %c0_1] : memref<8x10xf32, #tpu.memory_space<vmem>>, vector<8x10xf32>
    %c0_2 = arith.constant 0 : index
    %c0_3 = arith.constant 0 : index
    %4 = vector.load %arg3[%c0_2, %c0_3] : memref<8x1xi32, #tpu.memory_space<vmem>>, vector<8x1xi32>
    %c1_i32 = arith.constant 1 : i32
    %5 = arith.muli %arg0, %c1_i32 : i32
    %6 = arith.addi %5, %arg1 : i32
    %c8_i32 = arith.constant 8 : i32
    %7 = arith.muli %6, %c8_i32 : i32
    %8 = tpu.iota {dimensions = array<i32: 0>} : vector<8x1xi32>
    %9 = vector.broadcast %7 : i32 to vector<8x1xi32>
    %10 = arith.addi %9, %8 : vector<8x1xi32>
    %c8_i32_4 = arith.constant 8 : i32
    %11 = vector.broadcast %c8_i32_4 : i32 to vector<8x1xi32>
    %12 = arith.cmpi slt, %10, %11 : vector<8x1xi32>
    %c0_5 = arith.constant 0 : index
    %c0_6 = arith.constant 0 : index
    %13 = vector.load %arg6[%c0_5, %c0_6] : memref<1x10xi32, #tpu.memory_space<vmem>>, vector<1x10xi32>
    %14 = vector.shape_cast %13 : vector<1x10xi32> to vector<1x10xi32>
    %15 = vector.broadcast %14 : vector<1x10xi32> to vector<8x10xi32>
    %16 = vector.broadcast %4 : vector<8x1xi32> to vector<8x10xi32>
    %17 = arith.cmpi eq, %15, %16 : vector<8x10xi32>
    %cst = arith.constant dense<0xFF800000> : vector<8xf32>
    %18 = vector.multi_reduction <maximumf>, %3, %cst [1] : vector<8x10xf32> to vector<8xf32>
    %19 = vector.shape_cast %18 : vector<8xf32> to vector<8x1xf32>
    %cst_7 = arith.constant dense<0.000000e+00> : vector<8xf32>
    %20 = vector.multi_reduction <add>, %3, %cst_7 [1] : vector<8x10xf32> to vector<8xf32>
    %21 = vector.shape_cast %20 : vector<8xf32> to vector<8x1xf32>
    %cst_8 = arith.constant 0.000000e+00 : f32
    %22 = vector.broadcast %cst_8 : f32 to vector<8x10xf32>
    %23 = arith.select %17, %3, %22 : vector<8x10xi1>, vector<8x10xf32>
    %cst_9 = arith.constant dense<0.000000e+00> : vector<8xf32>
    %24 = vector.multi_reduction <add>, %23, %cst_9 [1] : vector<8x10xf32> to vector<8xf32>
    %25 = vector.shape_cast %24 : vector<8xf32> to vector<8x1xf32>
    %26 = vector.broadcast %19 : vector<8x1xf32> to vector<8x10xf32>
    %27 = arith.subf %3, %26 : vector<8x10xf32>
    %28 = math.exp %27 : vector<8x10xf32>
    %cst_10 = arith.constant dense<0.000000e+00> : vector<8xf32>
    %29 = vector.multi_reduction <add>, %28, %cst_10 [1] : vector<8x10xf32> to vector<8xf32>
    %30 = vector.shape_cast %29 : vector<8xf32> to vector<8x1xf32>
    %31 = math.log %30 : vector<8x1xf32>
    %32 = arith.addf %19, %31 : vector<8x1xf32>
    %33 = arith.subf %32, %25 : vector<8x1xf32>
    %cst_11 = arith.constant 1.000000e+01 : f32
    %34 = vector.broadcast %cst_11 : f32 to vector<8x1xf32>
    %35 = arith.mulf %34, %32 : vector<8x1xf32>
    %36 = arith.subf %35, %21 : vector<8x1xf32>
    %37 = arith.divf %33, %36 : vector<8x1xf32>
    %38 = arith.subf %25, %19 : vector<8x1xf32>
    %39 = math.exp %38 : vector<8x1xf32>
    %40 = arith.divf %39, %30 : vector<8x1xf32>
    %cst_12 = arith.constant 1.000000e-07 : f32
    %41 = vector.broadcast %cst_12 : f32 to vector<8x1xf32>
    %42 = arith.maximumf %40, %41 : vector<8x1xf32>
    %cst_13 = arith.constant 1.000000e+00 : f32
    %43 = vector.broadcast %cst_13 : f32 to vector<8x1xf32>
    %44 = arith.divf %43, %30 : vector<8x1xf32>
    %45 = vector.broadcast %44 : vector<8x1xf32> to vector<8x10xf32>
    %46 = arith.mulf %28, %45 : vector<8x10xf32>
    %cst_14 = arith.constant 1.000000e-07 : f32
    %47 = vector.broadcast %cst_14 : f32 to vector<8x10xf32>
    %48 = arith.maximumf %46, %47 : vector<8x10xf32>
    %cst_15 = arith.constant dense<0.000000e+00> : vector<8xf32>
    %49 = vector.multi_reduction <add>, %48, %cst_15 [1] : vector<8x10xf32> to vector<8xf32>
    %50 = vector.shape_cast %49 : vector<8xf32> to vector<8x1xf32>
    %51 = arith.subf %50, %42 : vector<8x1xf32>
    %cst_16 = arith.constant 9.21034049 : f32
    %52 = vector.broadcast %cst_16 : f32 to vector<8x1xf32>
    %53 = arith.mulf %52, %51 : vector<8x1xf32>
    %cst_17 = arith.constant 1.000000e+00 : f32
    %54 = vector.broadcast %cst_17 : f32 to vector<8x1xf32>
    %55 = arith.mulf %54, %37 : vector<8x1xf32>
    %cst_18 = arith.constant 1.000000e+00 : f32
    %56 = vector.broadcast %cst_18 : f32 to vector<8x1xf32>
    %57 = arith.mulf %56, %53 : vector<8x1xf32>
    %58 = arith.addf %55, %57 : vector<8x1xf32>
    %c0_19 = arith.constant 0 : index
    %c0_20 = arith.constant 0 : index
    %59 = vector.load %arg5[%c0_19, %c0_20] : memref<8x1xf32, #tpu.memory_space<vmem>>, vector<8x1xf32>
    %cst_21 = arith.constant 0.000000e+00 : f32
    %60 = vector.broadcast %cst_21 : f32 to vector<8x1xf32>
    %61 = arith.select %12, %58, %60 : vector<8x1xi1>, vector<8x1xf32>
    %62 = arith.addf %59, %61 : vector<8x1xf32>
    %c0_22 = arith.constant 0 : index
    %c0_23 = arith.constant 0 : index
    %63 = vector.load %arg5[%c0_22, %c0_23] : memref<8x1xf32, #tpu.memory_space<vmem>>, vector<8x1xf32>
    tpu.vector_store %arg5[%c0_22, %c0_23], %62 {strides = array<i32>} : memref<8x1xf32, #tpu.memory_space<vmem>>, vector<8x1xf32>,
    %c0_i32_24 = arith.constant 0 : i32
    %64 = arith.cmpi eq, %arg1, %c0_i32_24 : i32
    %65 = arith.extui %64 : i1 to i32
    %c0_i32_25 = arith.constant 0 : i32
    %66 = arith.cmpi ne, %65, %c0_i32_25 : i32
    scf.if %66 {
      %c0_26 = arith.constant 0 : index
      %c0_27 = arith.constant 0 : index
      %67 = vector.load %arg5[%c0_26, %c0_27] : memref<8x1xf32, #tpu.memory_space<vmem>>, vector<8x1xf32>
      %68 = vector.shape_cast %67 : vector<8x1xf32> to vector<1x8x1xf32>
      %cst_28 = arith.constant dense<0.000000e+00> : vector<1xf32>
      %69 = vector.multi_reduction <add>, %68, %cst_28 [1, 2] : vector<1x8x1xf32> to vector<1xf32>
      %70 = vector.shape_cast %69 : vector<1xf32> to vector<1x1x1xf32>
      %71 = vector.extract %70[0, 0, 0] : f32 from vector<1x1x1xf32>
      %72 = vector.broadcast %71 : f32 to vector<1x8x128xf32>
      %c0_29 = arith.constant 0 : index
      %c0_30 = arith.constant 0 : index
      %c0_31 = arith.constant 0 : index
      %73 = vector.load %arg4[%c0_29, %c0_30, %c0_31] : memref<1x8x128xf32, #tpu.memory_space<vmem>>, vector<1x8x128xf32>
      tpu.vector_store %arg4[%c0_29, %c0_30, %c0_31], %72 {strides = array<i32>} : memref<1x8x128xf32, #tpu.memory_space<vmem>>, vector<1x8x128xf32>,
    } else {
    }
    return
  }
  func.func @transform_0(%arg0: i32, %arg1: i32) -> (i32, i32) {
    %c1_i32 = arith.constant 1 : i32
    %0 = arith.muli %arg0, %c1_i32 : i32
    %1 = arith.addi %0, %arg1 : i32
    %c0_i32 = arith.constant 0 : i32
    %2 = arith.minsi %1, %c0_i32 : i32
    %c0_i32_0 = arith.constant 0 : i32
    %c0_i32_1 = arith.constant 0 : i32
    return %2, %c0_i32_0 : i32, i32
  }
  func.func @transform_1(%arg0: i32, %arg1: i32) -> (i32, i32) {
    %c1_i32 = arith.constant 1 : i32
    %0 = arith.muli %arg0, %c1_i32 : i32
    %1 = arith.addi %0, %arg1 : i32
    %c0_i32 = arith.constant 0 : i32
    %2 = arith.minsi %1, %c0_i32 : i32
    %c0_i32_0 = arith.constant 0 : i32
    %c0_i32_1 = arith.constant 0 : i32
    return %2, %c0_i32_0 : i32, i32
  }
  func.func @transform_2(%arg0: i32, %arg1: i32) -> (i32, i32, i32) {
    %c0_i32 = arith.constant 0 : i32
    %c0_i32_0 = arith.constant 0 : i32
    %c0_i32_1 = arith.constant 0 : i32
    return %arg0, %c0_i32, %c0_i32_0 : i32, i32, i32
  }
}

</mosaic_0001>

<llo_original>
// kernel: tpu_custom_call.1
$region0: #{tpu_custom_call.1}
  #allocation0 [shape = 'u32[]', space=smem, size = 0x4, offset = 0x4, fixed_abs, tag = 'smem constant byte address 0x4 - core index']
  #allocation1 [shape = 'u32[144,128]{1,0:T(1,128)}', space=vmem, size = 0x12000, scoped, tag = 'internal scratch']
  #allocation2 [shape = 'f32[8,1]{1,0:T(8,128)}', space=vmem, size = 0x1000, scoped, tag = 'scratch operand']
  #allocation3 [shape = 's32[1,10]{1,0:T(1,128)}', space=vmem, size = 0x200, scoped, tag = 'scratch operand']
  %s0 = inlined_call_operand.vmem [shape: f32[8,10], index: 0, kind: input, shape index: {}]
  %s1 = inlined_call_operand.vmem [shape: s32[8,1], index: 1, kind: input, shape index: {}]
  %s2 = inlined_call_operand.hbm [shape: f32[1,8,128], index: 2, kind: output, shape index: {}]
  %s3 = sld [smem:[#allocation0]]
  $region26: #{tpu_custom_call.1} parent=0
    _
  %s5 = ssub.s32 1, %s3
  %s6 = scalar_select 0, %s5, %s3
  $region1: #{tpu_custom_call.1} parent=0
    #allocation4 [shape = 'u8[4096]{0}', space=vmem, size = 0x1000, scoped, tag = 'output window, operand 0, single buffered']
    #allocation5 [shape = 's32[1]{0}', space=sflag, size = 0x4, scoped, tag = 'scoped memory for tpu_custom_call.1']
    %7 = vsyncpa [#allocation5], 0
    // Predicated region
    $region2: #{tpu_custom_call.1} parent=1 // pred_check
      _
    $region3: #{tpu_custom_call.1} parent=1 // pred_check_branch
      %9 = sbr.rel (0) target = $region5
    $region4: #{tpu_custom_call.1} parent=1 // pred_region
      %s10 = sadd.s32 0, 0
      %p11 = scmp.lt.s32.totalorder %s10, 0
      %s12 = scalar_select %p11, %s10, 0
      %p13 = scmp.lt.s32.totalorder %s12, 0
      %s14 = scalar_select %p13, %s12, 0
      %s15 = smul.addr %s14, 8
      %s16 = scalar_lea.vmem %s0, %s15
      %s17 = sadd.s32 0, 0
      %p18 = scmp.lt.s32.totalorder %s17, 0
      %s19 = scalar_select %p18, %s17, 0
    $region5: #{tpu_custom_call.1} parent=1 // pred_fallthru
      _
    // Predicated region
    $region6: #{tpu_custom_call.1} parent=1 // pred_check
      _
    $region7: #{tpu_custom_call.1} parent=1 // pred_check_branch
      %21 = sbr.rel (0) target = $region9
    $region8: #{tpu_custom_call.1} parent=1 // pred_region
      %s22 = sadd.s32 0, 0
      %p23 = scmp.lt.s32.totalorder %s22, 0
      %s24 = scalar_select %p23, %s22, 0
      %p25 = scmp.lt.s32.totalorder %s24, 0
      %s26 = scalar_select %p25, %s24, 0
      %s27 = smul.addr %s26, 8
      %s28 = scalar_lea.vmem %s1, %s27
      %s29 = sadd.s32 0, 0
      %p30 = scmp.lt.s32.totalorder %s29, 0
      %s31 = scalar_select %p30, %s29, 0
    $region9: #{tpu_custom_call.1} parent=1 // pred_fallthru
      _
    %s32 = sadd.s32 0, 0
    %p33 = scmp.lt.s32.totalorder %s32, 0
    %s34 = scalar_select %p33, %s32, 0
    %p35 = scmp.lt.s32.totalorder %s34, 0
    %s36 = scalar_select %p35, %s34, 0
    %s37 = smul.addr %s36, 8
    %s38 = scalar_lea.vmem %s0, %s37
    %s39 = sadd.s32 0, 0
    %p40 = scmp.lt.s32.totalorder %s39, 0
    %s41 = scalar_select %p40, %s39, 0
    %p42 = scmp.lt.s32.totalorder %s41, 0
    %s43 = scalar_select %p42, %s41, 0
    %s44 = smul.addr %s43, 8
    %s45 = scalar_lea.vmem %s1, %s44
    %s46 = sadd.s32 0, 0
    %p47 = scmp.lt.s32.totalorder %s46, 0
    %s48 = scalar_select %p47, %s46, 0
    %p49 = scmp.lt.s32.totalorder %s48, 0
    %s50 = scalar_select %p49, %s48, 0
    %s51 = smul.addr %s50, 8
    %s52 = scalar_lea.vmem %s0, %s51
    %s53 = sadd.s32 0, 0
    %p54 = scmp.lt.s32.totalorder %s53, 0
    %s55 = scalar_select %p54, %s53, 0
    %s56 = sadd.s32 0, 0
    %p57 = scmp.lt.s32.totalorder %s56, 0
    %s58 = scalar_select %p57, %s56, 0
    %p59 = scmp.lt.s32.totalorder %s58, 0
    %s60 = scalar_select %p59, %s58, 0
    %s61 = smul.addr %s60, 8
    %s62 = scalar_lea.vmem %s1, %s61
    %s63 = sadd.s32 0, 0
    %p64 = scmp.lt.s32.totalorder %s63, 0
    %s65 = scalar_select %p64, %s63, 0
    %p66 = scmp.eq.s32.totalorder 0, 0
    // Predicated region
    $region10: #{tpu_custom_call.1} parent=1 // pred_check
      %p67 = pneg %p66
    $region11: #{tpu_custom_call.1} parent=1 // pred_check_branch
      %69 = sbr.rel (%p67) target = $region13
    $region12: #{tpu_custom_call.1} parent=1 // pred_region
      %vm70 = vcmask 7168
      %71 = vst.msk [vmem:[#allocation2] sm:$0xff] %vm70, 0.0
      %v72 = vlaneseq
      %v73 = vand.u32 %v72, 127
      %vm74 = vcmask 73728
      %75 = vst.msk [vmem:[#allocation3] sm:$0x1] %vm74, %v73
    $region13: #{tpu_custom_call.1} parent=1 // pred_fallthru
      _
    %v76 = vld [vmem:[%s52] sm:$0xff]
    %v77 = vld [vmem:[%s62] sm:$0xff]
    %s78 = sadd.s32 0, 0
    %s79 = smul.u32 %s78, 8
    %v80 = vlaneseq
    %v81 = vshrl.u32 %v80, 7
    %v82 = vstv %s79
    %v83 = vadd.s32 %v82, %v81
    %vm84 = vcmp.lt.s32.totalorder %v83, 8
    %v85 = vld [vmem:[#allocation3] sm:$0x1]
    %v86 = vlaneseq
    %v87 = vshrl.u32 %v86, 7
    %v88 = vsub.s32 0, %v87
    %v89 = vrot.slane %v85, %v88
    %90 = vset.pattern.permute.xlu0 0
    %91 = vperm.xlu0 %90, %v77
    %v92 = vpop.permute.xlu0 %91
    %vm93 = vcmp.eq.s32.totalorder %v89, %v92
    %vm94 = vcmask 80896
    %v95 = vsel %vm94, %v76, -inf
    %96 = vmax.xlane.f32.xlu0 %v95
    %v97 = vpop.xlane.xlu0 %96
    %v98 = vsel %vm94, %v76, 0.0
    %99 = vadd.xlane.f32.xlu0 %v98
    %v100 = vpop.xlane.xlu0 %99
    %v101 = vsel %vm93, %v76, 0.0
    %v102 = vsel %vm94, %v101, 0.0
    %103 = vadd.xlane.f32.xlu0 %v102
    %v104 = vpop.xlane.xlu0 %103
    %v105 = vsub.f32 %v76, %v97
    %v106 = vmul.f32 %v105, 1.442695
    %v107 = vpow.pop %v106
    %v108 = vsel %vm94, %v107, 0.0
    %109 = vadd.xlane.f32.xlu0 %v108
    %v110 = vpop.xlane.xlu0 %109
    %v111 = vlog2.pop %v110
    %v112 = vmul.f32 %v111, 0.6931472
    %v113 = vadd.f32 %v97, %v112
    %v114 = vsub.f32 %v113, %v104
    %v115 = vmul.f32 %v113, 10.0
    %v116 = vsub.f32 %v115, %v100
    %v117 = vrcp.pop %v116
    %v118 = vmul.f32 %v114, %v117
    %v119 = vsub.f32 %v104, %v97
    %v120 = vmul.f32 %v119, 1.442695
    %v121 = vpow.pop %v120
    %v122 = vrcp.pop %v110
    %v123 = vmul.f32 %v121, %v122
    %v124 = vmax.f32 %v123, 1e-07
    %v125 = vmul.f32 1.0, %v122
    %v126 = vmul.f32 %v107, %v125
    %v127 = vmax.f32 %v126, 1e-07
    %v128 = vsel %vm94, %v127, 0.0
    %129 = vadd.xlane.f32.xlu0 %v128
    %v130 = vpop.xlane.xlu0 %129
    %v131 = vsub.f32 %v130, %v124
    %v132 = vmul.f32 %v131, 9.2103405
    %v133 = vadd.f32 %v118, %v132
    %v134 = vld [vmem:[#allocation2] sm:$0xff]
    %v135 = vsel %vm84, %v133, 0.0
    %v136 = vadd.f32 %v134, %v135
    %vm137 = vcmask 7168
    %138 = vst.msk [vmem:[#allocation2] sm:$0xff] %vm137, %v136
    // Predicated region
    $region14: #{tpu_custom_call.1} parent=1 // pred_check
      %p139 = pneg %p66
    $region15: #{tpu_custom_call.1} parent=1 // pred_check_branch
      %141 = sbr.rel (%p139) target = $region17
    $region16: #{tpu_custom_call.1} parent=1 // pred_region
      %v142 = vld [vmem:[#allocation2] sm:$0xff]
      %v143 = vsel %vm137, %v142, 0.0
      %144 = vadd.xlane.f32.xlu0 %v143
      %v145 = vpop.xlane.xlu0 %144
      %v146 = vrot.slane %v145, 4
      %v147 = vadd.f32 %v145, %v146
      %v148 = vrot.slane %v147, 2
      %v149 = vadd.f32 %v147, %v148
      %v150 = vrot.slane %v149, 1
      %v151 = vadd.f32 %v149, %v150
      %s152 = vtos %v151
      %v153 = vstv %s152
      %154 = vst [vmem:[#allocation4] sm:$0xff] %v153
    $region17: #{tpu_custom_call.1} parent=1 // pred_fallthru
      _
    // Predicated region
    $region18: #{tpu_custom_call.1} parent=1 // pred_check
      _
    $region19: #{tpu_custom_call.1} parent=1 // pred_check_branch
      %156 = sbr.rel (0) target = $region21
    $region20: #{tpu_custom_call.1} parent=1 // pred_region
      %s158 = ssub.s32 128, 128
      %159 = vsyncadd [#allocation5], %s158
      %s161 = sshll.u32 [#allocation4], 4
      %s162 = int_to_ptr.vmem [resolvable:$true] %s161
      %164 = dma.vmem_to_hbm [thread:$0]  %s162, 128, %s2, [#allocation5]
    $region21: #{tpu_custom_call.1} parent=1 // pred_fallthru
      _
    // Predicated region
    $region22: #{tpu_custom_call.1} parent=1 // pred_check
      _
    $region23: #{tpu_custom_call.1} parent=1 // pred_check_branch
      %166 = sbr.rel (0) target = $region25
    $region24: #{tpu_custom_call.1} parent=1 // pred_region
      %167 = dma.done [#allocation5], 128
    $region25: #{tpu_custom_call.1} parent=1 // pred_fallthru
      _
    %168 = vsyncpa [#allocation5], 1

</llo_original>
